<compile_context>
chip_gen: v7x
topology: tpu7x:2x2x1
jax: 0.10.0
libtpu: 0.0.40
codegen_flags: <defaults>
</compile_context>

<pallas_src>
import functools

import jax
import jax.numpy as jnp
from jax.experimental import pallas as pl
from jax.experimental.pallas import tpu as pltpu


def _round_up(n, m):
    return ((n + m - 1) // m) * m


def _mlp_kernel(x_ref, w1_ref, b1_ref, w2_ref, b2_ref, out_ref):
    # Hidden layer: x @ W1 + b1, ReLU (f32 on MXU + VPU).
    h = jnp.dot(x_ref[...], w1_ref[...], preferred_element_type=jnp.float32)
    h = jnp.maximum(h + b1_ref[...], 0.0)          # (TB, Hp) + (1, Hp)
    # Output layer: h @ W2 + b2.
    q = jnp.dot(h, w2_ref[...], preferred_element_type=jnp.float32)
    out_ref[...] = (q + b2_ref[...]).astype(out_ref.dtype)


def prepare_params(w1, b1, w2, b2):
    """One-time layout prep: transpose to (in, out) and pad lanes to 128.

    w1 : (H, F)  PyTorch Linear.weight layout
    b1 : (H,)
    w2 : (O, H)
    b2 : (O,)
    Returns (w1_t, b1_p, w2_t, b2_p, n_output).  Padding is with zeros, so the
    padded math is exactly equivalent to the unpadded math.
    """
    H, F = w1.shape
    O = w2.shape[0]
    Hp = _round_up(H, 128)
    Op = _round_up(O, 128)

    w1_t = jnp.zeros((F, Hp), jnp.float32).at[:, :H].set(
        jnp.asarray(w1, jnp.float32).T)
    b1_p = jnp.zeros((1, Hp), jnp.float32).at[:, :H].set(
        jnp.asarray(b1, jnp.float32))
    w2_t = jnp.zeros((Hp, Op), jnp.float32).at[:H, :O].set(
        jnp.asarray(w2, jnp.float32).T)
    b2_p = jnp.zeros((1, Op), jnp.float32).at[:, :O].set(
        jnp.asarray(b2, jnp.float32))
    return w1_t, b1_p, w2_t, b2_p, O


@functools.partial(jax.jit, static_argnames=("n_output",))
def _net_forward_impl(x, w1_t, b1_p, w2_t, b2_p, *, n_output):
    B, F = x.shape
    Hp = w1_t.shape[1]
    Op = w2_t.shape[1]

    # Batch tile: 8-sublane aligned, capped at 512 rows.  At these feature
    # widths (F=8, Hp/Op=128) a tile is well under 1 MiB, so double-buffered
    # tiles + resident weights fit comfortably even in v7x's 64 MiB VMEM.
    TB = min(512, _round_up(B, 8))
    B_pad = _round_up(B, TB)
    if B_pad != B:
        x = jnp.zeros((B_pad, F), x.dtype).at[:B].set(x)
    nb = B_pad // TB

    out = pl.pallas_call(
        _mlp_kernel,
        out_shape=jax.ShapeDtypeStruct((B_pad, Op), jnp.float32),
        grid=(nb,),
        in_specs=[
            pl.BlockSpec((TB, F), lambda i: (i, 0)),    # x tile (batch grid)
            pl.BlockSpec((F, Hp), lambda i: (0, 0)),    # W1 (VMEM-resident)
            pl.BlockSpec((1, Hp), lambda i: (0, 0)),    # b1
            pl.BlockSpec((Hp, Op), lambda i: (0, 0)),   # W2 (VMEM-resident)
            pl.BlockSpec((1, Op), lambda i: (0, 0)),    # b2
        ],
        out_specs=pl.BlockSpec((TB, Op), lambda i: (i, 0)),
        compiler_params=pltpu.CompilerParams(
            dimension_semantics=("parallel",)),
    )(x, w1_t, b1_p, w2_t, b2_p)

    return out[:B, :n_output]


def net_forward(x, params):
    """Forward pass with pre-prepared params (see prepare_params)."""
    w1_t, b1_p, w2_t, b2_p, n_output = params
    return _net_forward_impl(jnp.asarray(x, jnp.float32),
                             w1_t, b1_p, w2_t, b2_p, n_output=n_output)


def reference_forward(x, w1, b1, w2, b2):
    """Pure-JAX reference mirroring the PyTorch module exactly."""
    h = x @ w1.T + b1
    h = jnp.maximum(h, 0.0)
    return h @ w2.T + b2


if __name__ == "__main__":
    # Small DQN-ish sizes: n_feature=8, n_hidden=32, n_output=4, batch=2.
    n_feature, n_hidden, n_output = 8, 32, 4
    batch = 2

    key = jax.random.PRNGKey(0)
    kx, kw1, kb1, kw2, kb2, kx2 = jax.random.split(key, 6)

    x = jax.random.normal(kx, (batch, n_feature), dtype=jnp.float32)
    # Deterministic synthetic parameters (PyTorch Linear weight/bias shapes).
    w1 = jax.random.normal(kw1, (n_hidden, n_feature), dtype=jnp.float32) * 0.1
    b1 = jax.random.normal(kb1, (n_hidden,), dtype=jnp.float32) * 0.1
    w2 = jax.random.normal(kw2, (n_output, n_hidden), dtype=jnp.float32) * 0.1
    b2 = jax.random.normal(kb2, (n_output,), dtype=jnp.float32) * 0.1

    # One-time layout prep (hoisted out of the per-call path).
    params = prepare_params(w1, b1, w2, b2)

    out = jax.block_until_ready(net_forward(x, params))
    ref = reference_forward(x, w1, b1, w2, b2)
    assert out.shape == (batch, n_output)
    assert jnp.allclose(out, ref, atol=1e-5, rtol=1e-5), "mismatch vs reference"

    # Larger, non-aligned batch to exercise the batch grid + padding path.
    x_big = jax.random.normal(kx2, (300, n_feature), dtype=jnp.float32)
    out_big = jax.block_until_ready(net_forward(x_big, params))
    ref_big = reference_forward(x_big, w1, b1, w2, b2)
    assert out_big.shape == (300, n_output)
    assert jnp.allclose(out_big, ref_big, atol=1e-5, rtol=1e-5), "batch mismatch"

    print("KERNEL_OK")
</pallas_src>

<mosaic_0001>
module attributes {stable_mosaic.version = 11 : i64} {
  func.func @_mlp_kernel(%arg0: i32, %arg1: memref<8x8xf32, #tpu.memory_space<vmem>>, %arg2: memref<8x128xf32, #tpu.memory_space<vmem>>, %arg3: memref<1x128xf32, #tpu.memory_space<vmem>>, %arg4: memref<128x128xf32, #tpu.memory_space<vmem>>, %arg5: memref<1x128xf32, #tpu.memory_space<vmem>>, %arg6: memref<8x128xf32, #tpu.memory_space<vmem>>) attributes {dimension_semantics = [#tpu.dimension_semantics<parallel>], iteration_bounds = array<i64: 1>, scalar_prefetch = 0 : i64, scratch_operands = 0 : i64, tpu.core_type = #tpu.core_type<tc>, window_params = [{transform_indices = @transform_0, window_bounds = array<i64: 8, 8>}, {pipeline_mode = #tpu.pipeline_mode<synchronous>, transform_indices = @transform_1, window_bounds = array<i64: 8, 128>}, {pipeline_mode = #tpu.pipeline_mode<synchronous>, transform_indices = @transform_2, window_bounds = array<i64: 1, 128>}, {pipeline_mode = #tpu.pipeline_mode<synchronous>, transform_indices = @transform_3, window_bounds = array<i64: 128, 128>}, {pipeline_mode = #tpu.pipeline_mode<synchronous>, transform_indices = @transform_4, window_bounds = array<i64: 1, 128>}, {transform_indices = @transform_5, window_bounds = array<i64: 8, 128>}]} {
    %c0 = arith.constant 0 : index
    %c0_0 = arith.constant 0 : index
    %0 = vector.load %arg1[%c0, %c0_0] : memref<8x8xf32, #tpu.memory_space<vmem>>, vector<8x8xf32>
    %c0_1 = arith.constant 0 : index
    %c0_2 = arith.constant 0 : index
    %1 = vector.load %arg2[%c0_1, %c0_2] : memref<8x128xf32, #tpu.memory_space<vmem>>, vector<8x128xf32>
    %cst = arith.constant dense<0.000000e+00> : vector<8x128xf32>
    %2 = tpu.matmul %0, %1, %cst {dimension_numbers = #tpu.dot_dimension_numbers<[1], [0], [0], [1], [0, 0, 1, 1], [], []>} : vector<8x8xf32>, vector<8x128xf32>, vector<8x128xf32> -> vector<8x128xf32>
    %c0_3 = arith.constant 0 : index
    %c0_4 = arith.constant 0 : index
    %3 = vector.load %arg3[%c0_3, %c0_4] : memref<1x128xf32, #tpu.memory_space<vmem>>, vector<1x128xf32>
    %4 = vector.broadcast %3 : vector<1x128xf32> to vector<8x128xf32>
    %5 = arith.addf %2, %4 : vector<8x128xf32>
    %cst_5 = arith.constant 0.000000e+00 : f32
    %6 = vector.broadcast %cst_5 : f32 to vector<8x128xf32>
    %7 = arith.maximumf %5, %6 : vector<8x128xf32>
    %c0_6 = arith.constant 0 : index
    %c0_7 = arith.constant 0 : index
    %8 = vector.load %arg4[%c0_6, %c0_7] : memref<128x128xf32, #tpu.memory_space<vmem>>, vector<128x128xf32>
    %cst_8 = arith.constant dense<0.000000e+00> : vector<8x128xf32>
    %9 = tpu.matmul %7, %8, %cst_8 {dimension_numbers = #tpu.dot_dimension_numbers<[1], [0], [0], [1], [0, 0, 1, 1], [], []>} : vector<8x128xf32>, vector<128x128xf32>, vector<8x128xf32> -> vector<8x128xf32>
    %c0_9 = arith.constant 0 : index
    %c0_10 = arith.constant 0 : index
    %10 = vector.load %arg5[%c0_9, %c0_10] : memref<1x128xf32, #tpu.memory_space<vmem>>, vector<1x128xf32>
    %11 = vector.broadcast %10 : vector<1x128xf32> to vector<8x128xf32>
    %12 = arith.addf %9, %11 : vector<8x128xf32>
    %c0_11 = arith.constant 0 : index
    %c0_12 = arith.constant 0 : index
    %13 = vector.load %arg6[%c0_11, %c0_12] : memref<8x128xf32, #tpu.memory_space<vmem>>, vector<8x128xf32>
    tpu.vector_store %arg6[%c0_11, %c0_12], %12 {strides = array<i32>} : memref<8x128xf32, #tpu.memory_space<vmem>>, vector<8x128xf32>,
    return
  }
  func.func @transform_0(%arg0: i32) -> (i32, i32) {
    %c0_i32 = arith.constant 0 : i32
    %c0_i32_0 = arith.constant 0 : i32
    return %arg0, %c0_i32 : i32, i32
  }
  func.func @transform_1(%arg0: i32) -> (i32, i32) {
    %c0_i32 = arith.constant 0 : i32
    %c0_i32_0 = arith.constant 0 : i32
    %c0_i32_1 = arith.constant 0 : i32
    return %c0_i32, %c0_i32_0 : i32, i32
  }
  func.func @transform_2(%arg0: i32) -> (i32, i32) {
    %c0_i32 = arith.constant 0 : i32
    %c0_i32_0 = arith.constant 0 : i32
    %c0_i32_1 = arith.constant 0 : i32
    return %c0_i32, %c0_i32_0 : i32, i32
  }
  func.func @transform_3(%arg0: i32) -> (i32, i32) {
    %c0_i32 = arith.constant 0 : i32
    %c0_i32_0 = arith.constant 0 : i32
    %c0_i32_1 = arith.constant 0 : i32
    return %c0_i32, %c0_i32_0 : i32, i32
  }
  func.func @transform_4(%arg0: i32) -> (i32, i32) {
    %c0_i32 = arith.constant 0 : i32
    %c0_i32_0 = arith.constant 0 : i32
    %c0_i32_1 = arith.constant 0 : i32
    return %c0_i32, %c0_i32_0 : i32, i32
  }
  func.func @transform_5(%arg0: i32) -> (i32, i32) {
    %c0_i32 = arith.constant 0 : i32
    %c0_i32_0 = arith.constant 0 : i32
    return %arg0, %c0_i32 : i32, i32
  }
}

</mosaic_0001>

<llo_original>
// kernel: _net_forward_impl.1
$region0: #{_net_forward_impl.1}
  #allocation0 [shape = 'u32[]', space=smem, size = 0x4, offset = 0x4, fixed_abs, tag = 'smem constant byte address 0x4 - core index']
  #allocation1 [shape = 'u32[144,128]{1,0:T(1,128)}', space=vmem, size = 0x12000, scoped, tag = 'internal scratch']
  %s0 = inlined_call_operand.vmem [shape: f32[8,8], index: 0, kind: input, shape index: {}]
  %s1 = inlined_call_operand.vmem [shape: f32[8,128], index: 1, kind: input, shape index: {}]
  %s2 = inlined_call_operand.vmem [shape: f32[1,128], index: 2, kind: input, shape index: {}]
  %s3 = inlined_call_operand.hbm [shape: f32[128,128], index: 3, kind: input, shape index: {}]
  %s4 = inlined_call_operand.vmem [shape: f32[1,128], index: 4, kind: input, shape index: {}]
  %s5 = inlined_call_operand.vmem [shape: f32[8,128], index: 5, kind: output, shape index: {}]
  %s6 = sld [smem:[#allocation0]]
  $region34: #{_net_forward_impl.1} parent=0
    _
  %s8 = ssub.s32 1, %s6
  %s9 = scalar_select 0, %s8, %s6
  $region1: #{_net_forward_impl.1} parent=0
    #allocation2 [shape = 'u8[65536]{0}', space=vmem, size = 0x10000, scoped, tag = 'input window, operand 3, single buffered']
    #allocation3 [shape = 's32[1]{0}', space=sflag, size = 0x4, scoped, tag = 'scoped memory for _net_forward_impl.1']
    %10 = vsyncpa [#allocation3], 0
    // Predicated region
    $region2: #{_net_forward_impl.1} parent=1 // pred_check
      _
    $region3: #{_net_forward_impl.1} parent=1 // pred_check_branch
      %12 = sbr.rel (0) target = $region5
    $region4: #{_net_forward_impl.1} parent=1 // pred_region
      _
    $region5: #{_net_forward_impl.1} parent=1 // pred_fallthru
      _
    // Predicated region
    $region6: #{_net_forward_impl.1} parent=1 // pred_check
      _
    $region7: #{_net_forward_impl.1} parent=1 // pred_check_branch
      %14 = sbr.rel (0) target = $region9
    $region8: #{_net_forward_impl.1} parent=1 // pred_region
      _
    $region9: #{_net_forward_impl.1} parent=1 // pred_fallthru
      _
    // Predicated region
    $region10: #{_net_forward_impl.1} parent=1 // pred_check
      _
    $region11: #{_net_forward_impl.1} parent=1 // pred_check_branch
      %16 = sbr.rel (0) target = $region13
    $region12: #{_net_forward_impl.1} parent=1 // pred_region
      _
    $region13: #{_net_forward_impl.1} parent=1 // pred_fallthru
      _
    // Predicated region
    $region14: #{_net_forward_impl.1} parent=1 // pred_check
      _
    $region15: #{_net_forward_impl.1} parent=1 // pred_check_branch
      %18 = sbr.rel (0) target = $region17
    $region16: #{_net_forward_impl.1} parent=1 // pred_region
      %s20 = ssub.s32 2048, 2048
      %21 = vsyncadd [#allocation3], %s20
      %s22 = sshll.u32 [#allocation2], 4
      %s23 = int_to_ptr.vmem [resolvable:$true] %s22
      %28 = dma.hbm_to_vmem [thread:$0]  %s3, 2048, %s23, [#allocation3], 128, 128, 8
    $region17: #{_net_forward_impl.1} parent=1 // pred_fallthru
      _
    // Predicated region
    $region18: #{_net_forward_impl.1} parent=1 // pred_check
      _
    $region19: #{_net_forward_impl.1} parent=1 // pred_check_branch
      %30 = sbr.rel (0) target = $region21
    $region20: #{_net_forward_impl.1} parent=1 // pred_region
      _
    $region21: #{_net_forward_impl.1} parent=1 // pred_fallthru
      _
    // Predicated region
    $region22: #{_net_forward_impl.1} parent=1 // pred_check
      _
    $region23: #{_net_forward_impl.1} parent=1 // pred_check_branch
      %32 = sbr.rel (0) target = $region25
    $region24: #{_net_forward_impl.1} parent=1 // pred_region
      %33 = dma.done [#allocation3], 2048
    $region25: #{_net_forward_impl.1} parent=1 // pred_fallthru
      _
    %v34 = vld [vmem:[%s0] sm:$0xff]
    %v35 = vld [vmem:[%s1] sm:$0xff]
    %v36 = vld [vmem:[%s2] sm:$0x1]
    %v38 = vlaneseq
    %v39 = vshrl.u32 %v38, 7
    %v40 = vsub.s32 0, %v39
    %v41 = vrot.slane %v36, %v40
    %vm43 = vcmask 64512
    %v45 = vsel %vm43, %v34, 0
    %47 = vmatprep.subr.mxu0 0.0
    %48 = vmatpush1.msra.mxu0 %v35
    %49 = vmatprep.subr.mxu0 0.0
    %50 = vmatpush1.msra.mxu0 0.0
    %51 = vmatprep.subr.mxu0 0.0
    %52 = vmatpush1.msra.mxu0 0.0
    %53 = vmatprep.subr.mxu0 0.0
    %54 = vmatpush1.msra.mxu0 0.0
    %55 = vmatprep.subr.mxu0 0.0
    %56 = vmatpush1.msra.mxu0 0.0
    %57 = vmatprep.subr.mxu0 0.0
    %58 = vmatpush1.msra.mxu0 0.0
    %59 = vmatprep.subr.mxu0 0.0
    %60 = vmatpush1.msra.mxu0 0.0
    %61 = vmatprep.subr.mxu0 0.0
    %62 = vmatpush1.msra.mxu0 0.0
    %63 = vmatprep.subr.mxu0 0.0
    %64 = vmatpush1.msra.mxu0 0.0
    %65 = vmatprep.subr.mxu0 0.0
    %66 = vmatpush1.msra.mxu0 0.0
    %67 = vmatprep.subr.mxu0 0.0
    %68 = vmatpush1.msra.mxu0 0.0
    %69 = vmatprep.subr.mxu0 0.0
    %70 = vmatpush1.msra.mxu0 0.0
    %71 = vmatprep.subr.mxu0 0.0
    %72 = vmatpush1.msra.mxu0 0.0
    %73 = vmatprep.subr.mxu0 0.0
    %74 = vmatpush1.msra.mxu0 0.0
    %75 = vmatprep.subr.mxu0 0.0
    %76 = vmatpush1.msra.mxu0 0.0
    %77 = vmatprep.subr.mxu0 0.0
    %78 = vmatpush1.msra.mxu0 0.0
    %79 = vmatprep.subr.mxu0 0.0
    %80 = vmatpush1.msra.mxu0 0.0
    %81 = vmatprep.subr.mxu0 0.0
    %82 = vmatpush1.msra.mxu0 0.0
    %83 = vmatprep.subr.mxu0 0.0
    %84 = vmatpush1.msra.mxu0 0.0
    %85 = vmatprep.subr.mxu0 0.0
    %86 = vmatpush1.msra.mxu0 0.0
    %87 = vmatprep.subr.mxu0 0.0
    %88 = vmatpush1.msra.mxu0 0.0
    %89 = vmatprep.subr.mxu0 0.0
    %90 = vmatpush1.msra.mxu0 0.0
    %91 = vmatprep.subr.mxu0 0.0
    %92 = vmatpush1.msra.mxu0 0.0
    %93 = vmatprep.subr.mxu0 0.0
    %94 = vmatpush1.msra.mxu0 0.0
    %95 = vmatprep.subr.mxu0 0.0
    %96 = vmatpush1.msra.mxu0 0.0
    %97 = vmatprep.subr.mxu0 0.0
    %98 = vmatpush1.msra.mxu0 0.0
    %99 = vmatprep.subr.mxu0 0.0
    %100 = vmatpush1.msra.mxu0 0.0
    %101 = vmatprep.subr.mxu0 0.0
    %102 = vmatpush1.msra.mxu0 0.0
    %103 = vmatprep.subr.mxu0 0.0
    %104 = vmatpush1.msra.mxu0 0.0
    %105 = vmatprep.subr.mxu0 0.0
    %106 = vmatpush1.msra.mxu0 0.0
    %107 = vmatprep.subr.mxu0 0.0
    %108 = vmatpush1.msra.mxu0 0.0
    %109 = vmatprep.subr.mxu0 0.0
    %110 = vmatpush1.msra.mxu0 0.0
    %111 = vmatprep.mubr.f32.mxu0 0.0
    %112 = vmatmul.mubr.f32.gmra.mrb[0].mxu0 %v45
    %v113 = vpop.f32.mrb[0].mxu0
    %v114 = vadd.f32 %v41, %v113
    %v115 = vpop.f32.mrb[0].mxu0
    %116 = vdwg.mxu0
    %v117 = vmax.f32 %v114, 0.0
    %v118 = vld [vmem:[#allocation2] sm:$0xff]
    %v119 = vld [vmem:[#allocation2 + $0x8] sm:$0xff]
    %v120 = vld [vmem:[#allocation2 + $0x10] sm:$0xff]
    %v121 = vld [vmem:[#allocation2 + $0x18] sm:$0xff]
    %v122 = vld [vmem:[#allocation2 + $0x20] sm:$0xff]
    %v123 = vld [vmem:[#allocation2 + $0x28] sm:$0xff]
    %v124 = vld [vmem:[#allocation2 + $0x30] sm:$0xff]
    %v125 = vld [vmem:[#allocation2 + $0x38] sm:$0xff]
    %v126 = vld [vmem:[#allocation2 + $0x40] sm:$0xff]
    %v127 = vld [vmem:[#allocation2 + $0x48] sm:$0xff]
    %v128 = vld [vmem:[#allocation2 + $0x50] sm:$0xff]
    %v129 = vld [vmem:[#allocation2 + $0x58] sm:$0xff]
    %v130 = vld [vmem:[#allocation2 + $0x60] sm:$0xff]
    %v131 = vld [vmem:[#allocation2 + $0x68] sm:$0xff]
    %v132 = vld [vmem:[#allocation2 + $0x70] sm:$0xff]
    %v133 = vld [vmem:[#allocation2 + $0x78] sm:$0xff]
    %v134 = vld [vmem:[%s4] sm:$0x1]
    %v136 = vlaneseq
    %v137 = vshrl.u32 %v136, 7
    %v138 = vsub.s32 0, %v137
    %v139 = vrot.slane %v134, %v138
    %141 = vmatprep.subr.mxu0 0.0
    %142 = vmatpush1.msra.mxu0 %v118
    %143 = vmatprep.subr.mxu0 0.0
    %144 = vmatpush1.msra.mxu0 %v119
    %145 = vmatprep.subr.mxu0 0.0
    %146 = vmatpush1.msra.mxu0 %v120
    %147 = vmatprep.subr.mxu0 0.0
    %148 = vmatpush1.msra.mxu0 %v121
    %149 = vmatprep.subr.mxu0 0.0
    %150 = vmatpush1.msra.mxu0 %v122
    %151 = vmatprep.subr.mxu0 0.0
    %152 = vmatpush1.msra.mxu0 %v123
    %153 = vmatprep.subr.mxu0 0.0
    %154 = vmatpush1.msra.mxu0 %v124
    %155 = vmatprep.subr.mxu0 0.0
    %156 = vmatpush1.msra.mxu0 %v125
    %157 = vmatprep.subr.mxu0 0.0
    %158 = vmatpush1.msra.mxu0 %v126
    %159 = vmatprep.subr.mxu0 0.0
    %160 = vmatpush1.msra.mxu0 %v127
    %161 = vmatprep.subr.mxu0 0.0
    %162 = vmatpush1.msra.mxu0 %v128
    %163 = vmatprep.subr.mxu0 0.0
    %164 = vmatpush1.msra.mxu0 %v129
    %165 = vmatprep.subr.mxu0 0.0
    %166 = vmatpush1.msra.mxu0 %v130
    %167 = vmatprep.subr.mxu0 0.0
    %168 = vmatpush1.msra.mxu0 %v131
    %169 = vmatprep.subr.mxu0 0.0
    %170 = vmatpush1.msra.mxu0 %v132
    %171 = vmatprep.subr.mxu0 0.0
    %172 = vmatpush1.msra.mxu0 %v133
    %173 = vmatprep.subr.mxu0 0.0
    %174 = vmatpush1.msra.mxu0 0.0
    %175 = vmatprep.subr.mxu0 0.0
    %176 = vmatpush1.msra.mxu0 0.0
    %177 = vmatprep.subr.mxu0 0.0
    %178 = vmatpush1.msra.mxu0 0.0
    %179 = vmatprep.subr.mxu0 0.0
    %180 = vmatpush1.msra.mxu0 0.0
    %181 = vmatprep.subr.mxu0 0.0
    %182 = vmatpush1.msra.mxu0 0.0
    %183 = vmatprep.subr.mxu0 0.0
    %184 = vmatpush1.msra.mxu0 0.0
    %185 = vmatprep.subr.mxu0 0.0
    %186 = vmatpush1.msra.mxu0 0.0
    %187 = vmatprep.subr.mxu0 0.0
    %188 = vmatpush1.msra.mxu0 0.0
    %189 = vmatprep.subr.mxu0 0.0
    %190 = vmatpush1.msra.mxu0 0.0
    %191 = vmatprep.subr.mxu0 0.0
    %192 = vmatpush1.msra.mxu0 0.0
    %193 = vmatprep.subr.mxu0 0.0
    %194 = vmatpush1.msra.mxu0 0.0
    %195 = vmatprep.subr.mxu0 0.0
    %196 = vmatpush1.msra.mxu0 0.0
    %197 = vmatprep.subr.mxu0 0.0
    %198 = vmatpush1.msra.mxu0 0.0
    %199 = vmatprep.subr.mxu0 0.0
    %200 = vmatpush1.msra.mxu0 0.0
    %201 = vmatprep.subr.mxu0 0.0
    %202 = vmatpush1.msra.mxu0 0.0
    %203 = vmatprep.subr.mxu0 0.0
    %204 = vmatpush1.msra.mxu0 0.0
    %205 = vmatprep.mubr.f32.mxu0 0.0
    %206 = vmatmul.mubr.f32.gmra.mrb[0].mxu0 %v117
    %v207 = vpop.f32.mrb[0].mxu0
    %v208 = vadd.f32 %v139, %v207
    %v209 = vpop.f32.mrb[0].mxu0
    %210 = vdwg.mxu0
    %211 = vst [vmem:[%s5] sm:$0xff] %v208
    // Predicated region
    $region26: #{_net_forward_impl.1} parent=1 // pred_check
      _
    $region27: #{_net_forward_impl.1} parent=1 // pred_check_branch
      %213 = sbr.rel (0) target = $region29
    $region28: #{_net_forward_impl.1} parent=1 // pred_region
      _
    $region29: #{_net_forward_impl.1} parent=1 // pred_fallthru
      _
    // Predicated region
    $region30: #{_net_forward_impl.1} parent=1 // pred_check
      _
    $region31: #{_net_forward_impl.1} parent=1 // pred_check_branch
      %215 = sbr.rel (0) target = $region33
    $region32: #{_net_forward_impl.1} parent=1 // pred_region
      _
    $region33: #{_net_forward_impl.1} parent=1 // pred_fallthru
      _
    %216 = vsyncpa [#allocation3], 1

</llo_original>
